<compile_context>
chip_gen: v7x
topology: tpu7x:2x2x1
jax: 0.10.0
libtpu: 0.0.40
codegen_flags: <defaults>
</compile_context>

<pallas_src>
import jax
import jax.numpy as jnp
from jax.experimental import pallas as pl
from jax.experimental.pallas import tpu as pltpu


def stainnet_kernel(x_ref, w1_ref, b1_ref, w2_ref, b2_ref, w3_ref, b3_ref, o_ref):
    # x: (c_in, tile) — channels on sublanes, pixels on lanes.
    x = x_ref[...].astype(jnp.bfloat16)

    # ---- layer 1: (32,3) @ (3,tile) on the MXU (bf16 in / f32 acc) ---------
    h1 = jnp.dot(w1_ref[...], x, preferred_element_type=jnp.float32)
    h1 = jnp.maximum(h1 + b1_ref[...], 0.0).astype(jnp.bfloat16)

    # ---- layer 2: (32,32) @ (32,tile) ---------------------------------------
    h2 = jnp.dot(w2_ref[...], h1, preferred_element_type=jnp.float32)
    h2 = jnp.maximum(h2 + b2_ref[...], 0.0).astype(jnp.bfloat16)

    # ---- layer 3: (3,32) @ (32,tile) ----------------------------------------
    out = jnp.dot(w3_ref[...], h2, preferred_element_type=jnp.float32) + b3_ref[...]
    o_ref[...] = out.astype(o_ref.dtype)


def stainnet_forward(x_nchw, params, *, tile_p=32768):
    """x_nchw: (N, C_in, H, W). Returns (N, C_out, H, W) in the input dtype."""
    w1, b1, w2, b2, w3, b3 = params
    c_mid, c_in = w1.shape                      # PyTorch Conv2d layout: (C_out, C_in)
    c_out = w3.shape[0]

    n, c, h, w = x_nchw.shape
    assert c == c_in

    hw = h * w
    x_flat = x_nchw.reshape(n, c_in, hw)        # metadata-only reshape (no transpose)

    # Tile the pixel (lane) axis. If the tile does not cover the full axis it
    # must be a multiple of 128; ragged final blocks are padded by Pallas.
    if hw <= tile_p:
        tile = hw
    else:
        tile = max(128, (tile_p // 128) * 128)
    # v7x has 2 TensorCores; with N == 1 the batch axis gives no parallelism,
    # so keep at least 2 grid steps on the (parallel) pixel axis.
    if n == 1 and tile >= hw and hw > 2 * 128:
        tile = ((pl.cdiv(hw, 2) + 127) // 128) * 128

    grid = (n, pl.cdiv(hw, tile))

    # MXU operands in bf16; biases as f32 (C, 1) columns added into the f32
    # accumulator (broadcast along the lane/pixel axis in-kernel).
    w1b = w1.astype(jnp.bfloat16)
    w2b = w2.astype(jnp.bfloat16)
    w3b = w3.astype(jnp.bfloat16)
    b1c = b1.reshape(c_mid, 1).astype(jnp.float32)
    b2c = b2.reshape(c_mid, 1).astype(jnp.float32)
    b3c = b3.reshape(c_out, 1).astype(jnp.float32)

    itemsize = jnp.dtype(x_nchw.dtype).itemsize
    flops = 2 * n * hw * (c_in * c_mid + c_mid * c_mid + c_mid * c_out)
    bytes_accessed = (n * hw * (c_in + c_out) * itemsize
                      + 2 * (w1b.size + w2b.size + w3b.size)
                      + 4 * (b1c.size + b2c.size + b3c.size))
    cost = pl.CostEstimate(flops=flops, transcendentals=0,
                           bytes_accessed=bytes_accessed)

    out_flat = pl.pallas_call(
        stainnet_kernel,
        out_shape=jax.ShapeDtypeStruct((n, c_out, hw), x_nchw.dtype),
        grid_spec=pltpu.PrefetchScalarGridSpec(
            num_scalar_prefetch=0,
            grid=grid,
            in_specs=[
                pl.BlockSpec((None, c_in, tile), lambda b, i: (b, 0, i)),   # x tile
                pl.BlockSpec((c_mid, c_in), lambda b, i: (0, 0)),           # W1 (bf16)
                pl.BlockSpec((c_mid, 1), lambda b, i: (0, 0)),              # b1 (f32)
                pl.BlockSpec((c_mid, c_mid), lambda b, i: (0, 0)),          # W2 (bf16)
                pl.BlockSpec((c_mid, 1), lambda b, i: (0, 0)),              # b2 (f32)
                pl.BlockSpec((c_out, c_mid), lambda b, i: (0, 0)),          # W3 (bf16)
                pl.BlockSpec((c_out, 1), lambda b, i: (0, 0)),              # b3 (f32)
            ],
            out_specs=pl.BlockSpec((None, c_out, tile), lambda b, i: (b, 0, i)),
        ),
        compiler_params=pltpu.CompilerParams(
            dimension_semantics=("parallel", "parallel"),
            # Re-derived for tile=32768: ~16-18 MiB live worst case; 48 MiB
            # keeps headroom under v7x's 64 MiB physical VMEM.
            vmem_limit_bytes=48 * 1024 * 1024,
        ),
        cost_estimate=cost,
    )(x_flat, w1b, b1c, w2b, b2c, w3b, b3c)

    return out_flat.reshape(n, c_out, h, w)


def init_params(key, input_nc=3, output_nc=3, n_channel=32):
    """Deterministic synthetic params in PyTorch Conv2d(k=1) layout:
    W: (C_out, C_in) (conv weight squeezed), b: (C_out,)."""
    k1, k2, k3, k4, k5, k6 = jax.random.split(key, 6)
    w1 = jax.random.normal(k1, (n_channel, input_nc), jnp.float32) * 0.1
    b1 = jax.random.normal(k2, (n_channel,), jnp.float32) * 0.01
    w2 = jax.random.normal(k3, (n_channel, n_channel), jnp.float32) * 0.1
    b2 = jax.random.normal(k4, (n_channel,), jnp.float32) * 0.01
    w3 = jax.random.normal(k5, (output_nc, n_channel), jnp.float32) * 0.1
    b3 = jax.random.normal(k6, (output_nc,), jnp.float32) * 0.01
    return (w1, b1, w2, b2, w3, b3)


if __name__ == "__main__":
    key = jax.random.PRNGKey(0)
    kx, kp = jax.random.split(key)

    # small NCHW input consistent with StainNet(input_nc=3, output_nc=3)
    x = jax.random.uniform(kx, (2, 3, 16, 16), jnp.float32)
    params = init_params(kp)

    out = jax.block_until_ready(stainnet_forward(x, params))

    # Pure-JAX f32 reference of the same math (exact elementwise sums, no
    # matmul precision ambiguity on the reference side).
    w1, b1, w2, b2, w3, b3 = params

    def ref_conv1x1(wt, bt, t):  # wt: (O, C), bt: (O,), t: (N, C, P) -> (N, O, P)
        return jnp.sum(wt[None, :, :, None] * t[:, None, :, :], axis=2) + bt[None, :, None]

    xf = x.reshape(2, 3, -1)
    h1 = jnp.maximum(ref_conv1x1(w1, b1, xf), 0.0)
    h2 = jnp.maximum(ref_conv1x1(w2, b2, h1), 0.0)
    ref = ref_conv1x1(w3, b3, h2).reshape(2, 3, 16, 16)

    assert out.shape == (2, 3, 16, 16)
    # Precision contract: bf16 MXU operands / f32 accumulate (the same level of
    # matmul precision the previously-passing version's tolerance implied).
    assert jnp.allclose(out, ref, atol=1e-2, rtol=1e-2), float(jnp.max(jnp.abs(out - ref)))

    print("KERNEL_OK")
</pallas_src>

<mosaic_0001>
module attributes {stable_mosaic.version = 11 : i64} {
  func.func @stainnet_kernel(%arg0: i32, %arg1: i32, %arg2: memref<1x3x256xf32, #tpu.memory_space<vmem>>, %arg3: memref<32x3xbf16, #tpu.memory_space<vmem>>, %arg4: memref<32x1xf32, #tpu.memory_space<vmem>>, %arg5: memref<32x32xbf16, #tpu.memory_space<vmem>>, %arg6: memref<32x1xf32, #tpu.memory_space<vmem>>, %arg7: memref<3x32xbf16, #tpu.memory_space<vmem>>, %arg8: memref<3x1xf32, #tpu.memory_space<vmem>>, %arg9: memref<1x3x256xf32, #tpu.memory_space<vmem>>) attributes {dimension_semantics = [#tpu.dimension_semantics<parallel>, #tpu.dimension_semantics<parallel>], iteration_bounds = array<i64: 2, 1>, scalar_prefetch = 0 : i64, scratch_operands = 0 : i64, tpu.core_type = #tpu.core_type<tc>, window_params = [{transform_indices = @transform_0, window_bounds = array<i64: 1, 3, 256>}, {pipeline_mode = #tpu.pipeline_mode<synchronous>, transform_indices = @transform_1, window_bounds = array<i64: 32, 3>}, {pipeline_mode = #tpu.pipeline_mode<synchronous>, transform_indices = @transform_2, window_bounds = array<i64: 32, 1>}, {pipeline_mode = #tpu.pipeline_mode<synchronous>, transform_indices = @transform_3, window_bounds = array<i64: 32, 32>}, {pipeline_mode = #tpu.pipeline_mode<synchronous>, transform_indices = @transform_4, window_bounds = array<i64: 32, 1>}, {pipeline_mode = #tpu.pipeline_mode<synchronous>, transform_indices = @transform_5, window_bounds = array<i64: 3, 32>}, {pipeline_mode = #tpu.pipeline_mode<synchronous>, transform_indices = @transform_6, window_bounds = array<i64: 3, 1>}, {transform_indices = @transform_7, window_bounds = array<i64: 1, 3, 256>}]} {
    %c0 = arith.constant 0 : index
    %c0_0 = arith.constant 0 : index
    %c0_1 = arith.constant 0 : index
    %0 = vector.load %arg2[%c0, %c0_0, %c0_1] : memref<1x3x256xf32, #tpu.memory_space<vmem>>, vector<1x3x256xf32>
    %1 = vector.shape_cast %0 : vector<1x3x256xf32> to vector<3x256xf32>
    %2 = arith.truncf %1 : vector<3x256xf32> to vector<3x256xbf16>
    %c0_2 = arith.constant 0 : index
    %c0_3 = arith.constant 0 : index
    %3 = vector.load %arg3[%c0_2, %c0_3] : memref<32x3xbf16, #tpu.memory_space<vmem>>, vector<32x3xbf16>
    %cst = arith.constant dense<0.000000e+00> : vector<32x256xf32>
    %4 = tpu.matmul %3, %2, %cst {dimension_numbers = #tpu.dot_dimension_numbers<[1], [0], [0], [1], [0, 0, 1, 1], [], []>} : vector<32x3xbf16>, vector<3x256xbf16>, vector<32x256xf32> -> vector<32x256xf32>
    %c0_4 = arith.constant 0 : index
    %c0_5 = arith.constant 0 : index
    %5 = vector.load %arg4[%c0_4, %c0_5] : memref<32x1xf32, #tpu.memory_space<vmem>>, vector<32x1xf32>
    %6 = vector.broadcast %5 : vector<32x1xf32> to vector<32x256xf32>
    %7 = arith.addf %4, %6 : vector<32x256xf32>
    %cst_6 = arith.constant 0.000000e+00 : f32
    %8 = vector.broadcast %cst_6 : f32 to vector<32x256xf32>
    %9 = arith.maximumf %7, %8 : vector<32x256xf32>
    %10 = arith.truncf %9 : vector<32x256xf32> to vector<32x256xbf16>
    %c0_7 = arith.constant 0 : index
    %c0_8 = arith.constant 0 : index
    %11 = vector.load %arg5[%c0_7, %c0_8] : memref<32x32xbf16, #tpu.memory_space<vmem>>, vector<32x32xbf16>
    %cst_9 = arith.constant dense<0.000000e+00> : vector<32x256xf32>
    %12 = tpu.matmul %11, %10, %cst_9 {dimension_numbers = #tpu.dot_dimension_numbers<[1], [0], [0], [1], [0, 0, 1, 1], [], []>} : vector<32x32xbf16>, vector<32x256xbf16>, vector<32x256xf32> -> vector<32x256xf32>
    %c0_10 = arith.constant 0 : index
    %c0_11 = arith.constant 0 : index
    %13 = vector.load %arg6[%c0_10, %c0_11] : memref<32x1xf32, #tpu.memory_space<vmem>>, vector<32x1xf32>
    %14 = vector.broadcast %13 : vector<32x1xf32> to vector<32x256xf32>
    %15 = arith.addf %12, %14 : vector<32x256xf32>
    %cst_12 = arith.constant 0.000000e+00 : f32
    %16 = vector.broadcast %cst_12 : f32 to vector<32x256xf32>
    %17 = arith.maximumf %15, %16 : vector<32x256xf32>
    %18 = arith.truncf %17 : vector<32x256xf32> to vector<32x256xbf16>
    %c0_13 = arith.constant 0 : index
    %c0_14 = arith.constant 0 : index
    %19 = vector.load %arg7[%c0_13, %c0_14] : memref<3x32xbf16, #tpu.memory_space<vmem>>, vector<3x32xbf16>
    %cst_15 = arith.constant dense<0.000000e+00> : vector<3x256xf32>
    %20 = tpu.matmul %19, %18, %cst_15 {dimension_numbers = #tpu.dot_dimension_numbers<[1], [0], [0], [1], [0, 0, 1, 1], [], []>} : vector<3x32xbf16>, vector<32x256xbf16>, vector<3x256xf32> -> vector<3x256xf32>
    %c0_16 = arith.constant 0 : index
    %c0_17 = arith.constant 0 : index
    %21 = vector.load %arg8[%c0_16, %c0_17] : memref<3x1xf32, #tpu.memory_space<vmem>>, vector<3x1xf32>
    %22 = vector.broadcast %21 : vector<3x1xf32> to vector<3x256xf32>
    %23 = arith.addf %20, %22 : vector<3x256xf32>
    %c0_18 = arith.constant 0 : index
    %c0_19 = arith.constant 0 : index
    %c0_20 = arith.constant 0 : index
    %24 = vector.load %arg9[%c0_18, %c0_19, %c0_20] : memref<1x3x256xf32, #tpu.memory_space<vmem>>, vector<1x3x256xf32>
    %25 = vector.shape_cast %24 : vector<1x3x256xf32> to vector<3x256xf32>
    %26 = vector.shape_cast %23 : vector<3x256xf32> to vector<1x3x256xf32>
    tpu.vector_store %arg9[%c0_18, %c0_19, %c0_20], %26 {strides = array<i32>} : memref<1x3x256xf32, #tpu.memory_space<vmem>>, vector<1x3x256xf32>,
    return
  }
  func.func @transform_0(%arg0: i32, %arg1: i32) -> (i32, i32, i32) {
    %c0_i32 = arith.constant 0 : i32
    %c0_i32_0 = arith.constant 0 : i32
    return %arg0, %c0_i32, %arg1 : i32, i32, i32
  }
  func.func @transform_1(%arg0: i32, %arg1: i32) -> (i32, i32) {
    %c0_i32 = arith.constant 0 : i32
    %c0_i32_0 = arith.constant 0 : i32
    %c0_i32_1 = arith.constant 0 : i32
    return %c0_i32, %c0_i32_0 : i32, i32
  }
  func.func @transform_2(%arg0: i32, %arg1: i32) -> (i32, i32) {
    %c0_i32 = arith.constant 0 : i32
    %c0_i32_0 = arith.constant 0 : i32
    %c0_i32_1 = arith.constant 0 : i32
    return %c0_i32, %c0_i32_0 : i32, i32
  }
  func.func @transform_3(%arg0: i32, %arg1: i32) -> (i32, i32) {
    %c0_i32 = arith.constant 0 : i32
    %c0_i32_0 = arith.constant 0 : i32
    %c0_i32_1 = arith.constant 0 : i32
    return %c0_i32, %c0_i32_0 : i32, i32
  }
  func.func @transform_4(%arg0: i32, %arg1: i32) -> (i32, i32) {
    %c0_i32 = arith.constant 0 : i32
    %c0_i32_0 = arith.constant 0 : i32
    %c0_i32_1 = arith.constant 0 : i32
    return %c0_i32, %c0_i32_0 : i32, i32
  }
  func.func @transform_5(%arg0: i32, %arg1: i32) -> (i32, i32) {
    %c0_i32 = arith.constant 0 : i32
    %c0_i32_0 = arith.constant 0 : i32
    %c0_i32_1 = arith.constant 0 : i32
    return %c0_i32, %c0_i32_0 : i32, i32
  }
  func.func @transform_6(%arg0: i32, %arg1: i32) -> (i32, i32) {
    %c0_i32 = arith.constant 0 : i32
    %c0_i32_0 = arith.constant 0 : i32
    %c0_i32_1 = arith.constant 0 : i32
    return %c0_i32, %c0_i32_0 : i32, i32
  }
  func.func @transform_7(%arg0: i32, %arg1: i32) -> (i32, i32, i32) {
    %c0_i32 = arith.constant 0 : i32
    %c0_i32_0 = arith.constant 0 : i32
    return %arg0, %c0_i32, %arg1 : i32, i32, i32
  }
}

</mosaic_0001>

<llo_original>
// kernel: tpu_custom_call.1
$region0: #{tpu_custom_call.1}
  #allocation0 [shape = 'u32[]', space=smem, size = 0x4, offset = 0x4, fixed_abs, tag = 'smem constant byte address 0x4 - core index']
  #allocation1 [shape = 'u32[144,128]{1,0:T(1,128)}', space=vmem, size = 0x12000, scoped, tag = 'internal scratch']
  %s0 = inlined_call_operand.vmem [shape: f32[2,3,256], index: 0, kind: input, shape index: {}]
  %s1 = inlined_call_operand.vmem [shape: bf16[32,3], index: 1, kind: input, shape index: {}]
  %s2 = inlined_call_operand.vmem [shape: f32[32,1], index: 2, kind: input, shape index: {}]
  %s3 = inlined_call_operand.vmem [shape: bf16[32,32], index: 3, kind: input, shape index: {}]
  %s4 = inlined_call_operand.vmem [shape: f32[32,1], index: 4, kind: input, shape index: {}]
  %s5 = inlined_call_operand.vmem [shape: bf16[3,32], index: 5, kind: input, shape index: {}]
  %s6 = inlined_call_operand.vmem [shape: f32[3,1], index: 6, kind: input, shape index: {}]
  %s7 = inlined_call_operand.vmem [shape: f32[2,3,256], index: 7, kind: output, shape index: {}]
  %s8 = sld [smem:[#allocation0]]
  $region61: #{tpu_custom_call.1} parent=0
    _
  %s10 = ssub.s32 1, %s8
  %s11 = scalar_select 0, %s10, %s8
  loop: start=0, step=1, limit=4
  $region2: #{tpu_custom_call.1} parent=0 // loop_pre_header
    _
  $region3: #{tpu_custom_call.1} parent=0 // loop_header
    %s13 = sphi 0, %s17
    %p14 = scmp.ge.s32.totalorder %s13, 4
    %s20 = sphi 0, %s32
    %s21 = sphi 0, %s28
    %s22 = sphi 0, %s20
    %s23 = sphi 0, %s21
    %s24 = sphi 0, %s22
    %s25 = sphi 0, %s23
    %s37 = sphi 0, %s39
    %s40 = sphi 0, %s37
    %s41 = sphi 0, %s40
    %s57 = sphi 0, %s41
    %s61 = sphi 0, %s61
    %s63 = sphi 0, %s61
    %s64 = sphi 0, %s63
    %s78 = sphi 0, %s64
    %s82 = sphi 0, %s82
    %s84 = sphi 0, %s82
    %s85 = sphi 0, %s84
    %s99 = sphi 0, %s85
    %s103 = sphi 0, %s103
    %s105 = sphi 0, %s103
    %s106 = sphi 0, %s105
    %s120 = sphi 0, %s106
    %s124 = sphi 0, %s124
    %s126 = sphi 0, %s124
    %s127 = sphi 0, %s126
    %s141 = sphi 0, %s127
    %s145 = sphi 0, %s145
    %s147 = sphi 0, %s145
    %s148 = sphi 0, %s147
    %s162 = sphi 0, %s148
    %s166 = sphi 0, %s166
    %s168 = sphi 0, %s166
    %s169 = sphi 0, %s168
    %s183 = sphi 0, %s169
    %s191 = sphi 0, %s193
    %s194 = sphi 0, %s191
    %s195 = sphi 0, %s194
    %s211 = sphi 0, %s195
  $region4: #{tpu_custom_call.1} parent=0 // loop_header_branch
    %16 = sbr.rel (%p14) target = $region8
  $region5: #{tpu_custom_call.1} parent=0 // loop_body
    %s18 = ssub.s32 %s13, 1
    %s19 = ssub.s32 %s13, 2
    %s26 = sadd.s32 1, %s21
    %p27 = scmp.ge.s32.totalorder %s26, 1
    %s28 = scalar_select %p27, 0, %s26
    %s29 = sadd.s32 1, %s20
    %s30 = scalar_select %p27, %s29, %s20
    %p31 = scmp.ge.s32.totalorder %s30, 2
    %s32 = scalar_select %p31, 0, %s30
    %s33 = ssub.s32 %s20, %s32
    %s34 = ssub.s32 %s21, %s28
    %s35 = sor.u32 %s33, %s34
    %p36 = scmp.eq.s32.totalorder %s35, 0
    %s38 = sadd.s32 %s37, 1
    %s39 = scalar_select %p36, %s37, %s38
    %p42 = pneg %p36
    %p43 = scmp.eq.s32.totalorder %s13, 1
    %p44 = por %p42, %p43
    %p45 = scmp.ne.s32.totalorder %s37, %s40
    %p46 = scmp.eq.s32.totalorder %s13, 0
    %p47 = por %p45, %p46
    %p48 = scmp.ne.s32.totalorder %s37, %s40
    %p49 = scmp.eq.s32.totalorder %s18, 1
    %p50 = por %p48, %p49
    %p51 = scmp.ne.s32.totalorder %s40, %s41
    %p52 = scmp.eq.s32.totalorder %s18, 0
    %p53 = por %p51, %p52
    %p54 = scmp.ne.s32.totalorder %s40, %s41
    %p55 = scmp.eq.s32.totalorder %s19, 1
    %p56 = por %p54, %p55
    %p58 = scmp.ne.s32.totalorder %s41, %s57
    %p59 = scmp.eq.s32.totalorder %s19, 0
    %p60 = por %p58, %p59
    %s62 = sadd.s32 %s61, 1
    %p65 = scmp.eq.s32.totalorder %s13, 1
    %p66 = scmp.ne.s32.totalorder %s61, %s63
    %p67 = scmp.eq.s32.totalorder %s13, 0
    %p68 = por %p66, %p67
    %p69 = scmp.ne.s32.totalorder %s61, %s63
    %p70 = scmp.eq.s32.totalorder %s18, 1
    %p71 = por %p69, %p70
    %p72 = scmp.ne.s32.totalorder %s63, %s64
    %p73 = scmp.eq.s32.totalorder %s18, 0
    %p74 = por %p72, %p73
    %p75 = scmp.ne.s32.totalorder %s63, %s64
    %p76 = scmp.eq.s32.totalorder %s19, 1
    %p77 = por %p75, %p76
    %p79 = scmp.ne.s32.totalorder %s64, %s78
    %p80 = scmp.eq.s32.totalorder %s19, 0
    %p81 = por %p79, %p80
    %s83 = sadd.s32 %s82, 1
    %p86 = scmp.eq.s32.totalorder %s13, 1
    %p87 = scmp.ne.s32.totalorder %s82, %s84
    %p88 = scmp.eq.s32.totalorder %s13, 0
    %p89 = por %p87, %p88
    %p90 = scmp.ne.s32.totalorder %s82, %s84
    %p91 = scmp.eq.s32.totalorder %s18, 1
    %p92 = por %p90, %p91
    %p93 = scmp.ne.s32.totalorder %s84, %s85
    %p94 = scmp.eq.s32.totalorder %s18, 0
    %p95 = por %p93, %p94
    %p96 = scmp.ne.s32.totalorder %s84, %s85
    %p97 = scmp.eq.s32.totalorder %s19, 1
    %p98 = por %p96, %p97
    %p100 = scmp.ne.s32.totalorder %s85, %s99
    %p101 = scmp.eq.s32.totalorder %s19, 0
    %p102 = por %p100, %p101
    %s104 = sadd.s32 %s103, 1
    %p107 = scmp.eq.s32.totalorder %s13, 1
    %p108 = scmp.ne.s32.totalorder %s103, %s105
    %p109 = scmp.eq.s32.totalorder %s13, 0
    %p110 = por %p108, %p109
    %p111 = scmp.ne.s32.totalorder %s103, %s105
    %p112 = scmp.eq.s32.totalorder %s18, 1
    %p113 = por %p111, %p112
    %p114 = scmp.ne.s32.totalorder %s105, %s106
    %p115 = scmp.eq.s32.totalorder %s18, 0
    %p116 = por %p114, %p115
    %p117 = scmp.ne.s32.totalorder %s105, %s106
    %p118 = scmp.eq.s32.totalorder %s19, 1
    %p119 = por %p117, %p118
    %p121 = scmp.ne.s32.totalorder %s106, %s120
    %p122 = scmp.eq.s32.totalorder %s19, 0
    %p123 = por %p121, %p122
    %s125 = sadd.s32 %s124, 1
    %p128 = scmp.eq.s32.totalorder %s13, 1
    %p129 = scmp.ne.s32.totalorder %s124, %s126
    %p130 = scmp.eq.s32.totalorder %s13, 0
    %p131 = por %p129, %p130
    %p132 = scmp.ne.s32.totalorder %s124, %s126
    %p133 = scmp.eq.s32.totalorder %s18, 1
    %p134 = por %p132, %p133
    %p135 = scmp.ne.s32.totalorder %s126, %s127
    %p136 = scmp.eq.s32.totalorder %s18, 0
    %p137 = por %p135, %p136
    %p138 = scmp.ne.s32.totalorder %s126, %s127
    %p139 = scmp.eq.s32.totalorder %s19, 1
    %p140 = por %p138, %p139
    %p142 = scmp.ne.s32.totalorder %s127, %s141
    %p143 = scmp.eq.s32.totalorder %s19, 0
    %p144 = por %p142, %p143
    %s146 = sadd.s32 %s145, 1
    %p149 = scmp.eq.s32.totalorder %s13, 1
    %p150 = scmp.ne.s32.totalorder %s145, %s147
    %p151 = scmp.eq.s32.totalorder %s13, 0
    %p152 = por %p150, %p151
    %p153 = scmp.ne.s32.totalorder %s145, %s147
    %p154 = scmp.eq.s32.totalorder %s18, 1
    %p155 = por %p153, %p154
    %p156 = scmp.ne.s32.totalorder %s147, %s148
    %p157 = scmp.eq.s32.totalorder %s18, 0
    %p158 = por %p156, %p157
    %p159 = scmp.ne.s32.totalorder %s147, %s148
    %p160 = scmp.eq.s32.totalorder %s19, 1
    %p161 = por %p159, %p160
    %p163 = scmp.ne.s32.totalorder %s148, %s162
    %p164 = scmp.eq.s32.totalorder %s19, 0
    %p165 = por %p163, %p164
    %s167 = sadd.s32 %s166, 1
    %p170 = scmp.eq.s32.totalorder %s13, 1
    %p171 = scmp.ne.s32.totalorder %s166, %s168
    %p172 = scmp.eq.s32.totalorder %s13, 0
    %p173 = por %p171, %p172
    %p174 = scmp.ne.s32.totalorder %s166, %s168
    %p175 = scmp.eq.s32.totalorder %s18, 1
    %p176 = por %p174, %p175
    %p177 = scmp.ne.s32.totalorder %s168, %s169
    %p178 = scmp.eq.s32.totalorder %s18, 0
    %p179 = por %p177, %p178
    %p180 = scmp.ne.s32.totalorder %s168, %s169
    %p181 = scmp.eq.s32.totalorder %s19, 1
    %p182 = por %p180, %p181
    %p184 = scmp.ne.s32.totalorder %s169, %s183
    %p185 = scmp.eq.s32.totalorder %s19, 0
    %p186 = por %p184, %p185
    %s187 = ssub.s32 %s20, %s32
    %s188 = ssub.s32 %s21, %s28
    %s189 = sor.u32 %s187, %s188
    %p190 = scmp.eq.s32.totalorder %s189, 0
    %s192 = sadd.s32 %s191, 1
    %s193 = scalar_select %p190, %s191, %s192
    %p196 = pneg %p190
    %p197 = scmp.eq.s32.totalorder %s13, 1
    %p198 = por %p196, %p197
    %p199 = scmp.ne.s32.totalorder %s191, %s194
    %p200 = scmp.eq.s32.totalorder %s13, 0
    %p201 = por %p199, %p200
    %p202 = scmp.ne.s32.totalorder %s191, %s194
    %p203 = scmp.eq.s32.totalorder %s18, 1
    %p204 = por %p202, %p203
    %p205 = scmp.ne.s32.totalorder %s194, %s195
    %p206 = scmp.eq.s32.totalorder %s18, 0
    %p207 = por %p205, %p206
    %p208 = scmp.ne.s32.totalorder %s194, %s195
    %p209 = scmp.eq.s32.totalorder %s19, 1
    %p210 = por %p208, %p209
    %p212 = scmp.ne.s32.totalorder %s195, %s211
    %p213 = scmp.eq.s32.totalorder %s19, 0
    %p214 = por %p212, %p213
    %p215 = scmp.le.s32.totalorder 1, %s13
    %p216 = scmp.lt.s32.totalorder %s13, 3
    %p217 = pnand %p215, %p216
    %p218 = pneg %p217
    // Predicated region
    $region9: #{tpu_custom_call.1} parent=5 // pred_check
      _
    $region10: #{tpu_custom_call.1} parent=5 // pred_check_branch
      %220 = sbr.rel (%p217) target = $region12
    $region11: #{tpu_custom_call.1} parent=5 // pred_region
      %s221 = ssub.s32 %s13, 1
      // Predicated region
      $region13: #{tpu_custom_call.1} parent=11 // pred_check
        %p222 = pneg %p74
      $region14: #{tpu_custom_call.1} parent=11 // pred_check_branch
        %224 = sbr.rel (%p222) target = $region16
      $region15: #{tpu_custom_call.1} parent=11 // pred_region
        _
      $region16: #{tpu_custom_call.1} parent=11 // pred_fallthru
        _
      // Predicated region
      $region17: #{tpu_custom_call.1} parent=11 // pred_check
        %p225 = pneg %p95
      $region18: #{tpu_custom_call.1} parent=11 // pred_check_branch
        %227 = sbr.rel (%p225) target = $region20
      $region19: #{tpu_custom_call.1} parent=11 // pred_region
        _
      $region20: #{tpu_custom_call.1} parent=11 // pred_fallthru
        _
      // Predicated region
      $region21: #{tpu_custom_call.1} parent=11 // pred_check
        %p228 = pneg %p116
      $region22: #{tpu_custom_call.1} parent=11 // pred_check_branch
        %230 = sbr.rel (%p228) target = $region24
      $region23: #{tpu_custom_call.1} parent=11 // pred_region
        _
      $region24: #{tpu_custom_call.1} parent=11 // pred_fallthru
        _
      // Predicated region
      $region25: #{tpu_custom_call.1} parent=11 // pred_check
        %p231 = pneg %p137
      $region26: #{tpu_custom_call.1} parent=11 // pred_check_branch
        %233 = sbr.rel (%p231) target = $region28
      $region27: #{tpu_custom_call.1} parent=11 // pred_region
        _
      $region28: #{tpu_custom_call.1} parent=11 // pred_fallthru
        _
      // Predicated region
      $region29: #{tpu_custom_call.1} parent=11 // pred_check
        %p234 = pneg %p158
      $region30: #{tpu_custom_call.1} parent=11 // pred_check_branch
        %236 = sbr.rel (%p234) target = $region32
      $region31: #{tpu_custom_call.1} parent=11 // pred_region
        _
      $region32: #{tpu_custom_call.1} parent=11 // pred_fallthru
        _
      // Predicated region
      $region33: #{tpu_custom_call.1} parent=11 // pred_check
        %p237 = pneg %p179
      $region34: #{tpu_custom_call.1} parent=11 // pred_check_branch
        %239 = sbr.rel (%p237) target = $region36
      $region35: #{tpu_custom_call.1} parent=11 // pred_region
        _
      $region36: #{tpu_custom_call.1} parent=11 // pred_fallthru
        _
    $region12: #{tpu_custom_call.1} parent=5 // pred_fallthru
      _
    %p240 = scmp.lt.s32.totalorder %s13, 2
    // Predicated region
    $region37: #{tpu_custom_call.1} parent=5 // pred_check
      %p241 = pneg %p240
    $region38: #{tpu_custom_call.1} parent=5 // pred_check_branch
      %243 = sbr.rel (%p241) target = $region40
    $region39: #{tpu_custom_call.1} parent=5 // pred_region
      // Predicated region
      $region41: #{tpu_custom_call.1} parent=39 // pred_check
        %p244 = pneg %p47
      $region42: #{tpu_custom_call.1} parent=39 // pred_check_branch
        %246 = sbr.rel (%p244) target = $region44
      $region43: #{tpu_custom_call.1} parent=39 // pred_region
        %s247 = smul.u32 2, %s21
        %p248 = scmp.lt.s32.totalorder %s20, 1
        %s249 = scalar_select %p248, %s20, 1
        %p250 = scmp.lt.s32.totalorder %s247, 1
        %s251 = scalar_select %p250, %s247, 1
        %s252 = smul.addr %s249, 2
        %s253 = sadd.s32 %s251, %s252
        %s254 = smul.addr %s253, 4
        %s255 = scalar_lea.vmem %s0, %s254
        %s256 = smul.u32 2, %s21
      $region44: #{tpu_custom_call.1} parent=39 // pred_fallthru
        _
    $region40: #{tpu_custom_call.1} parent=5 // pred_fallthru
      _
    %p257 = scmp.le.s32.totalorder 1, %s13
    %p258 = scmp.lt.s32.totalorder %s13, 3
    %p259 = pnand %p257, %p258
    %p260 = pneg %p259
    // Predicated region
    $region45: #{tpu_custom_call.1} parent=5 // pred_check
      _
    $region46: #{tpu_custom_call.1} parent=5 // pred_check_branch
      %262 = sbr.rel (%p259) target = $region48
    $region47: #{tpu_custom_call.1} parent=5 // pred_region
      %s263 = ssub.s32 %s13, 1
      %s264 = smul.u32 2, %s23
      %p265 = scmp.lt.s32.totalorder %s22, 1
      %s266 = scalar_select %p265, %s22, 1
      %p267 = scmp.lt.s32.totalorder %s264, 1
      %s268 = scalar_select %p267, %s264, 1
      %s269 = smul.addr %s266, 2
      %s270 = sadd.s32 %s268, %s269
      %s271 = smul.addr %s270, 4
      %s272 = scalar_lea.vmem %s0, %s271
      %p273 = pneg %p53
      %p274 = pneg %p50
      %p275 = pneg %p74
      %p276 = pneg %p71
      %p277 = pneg %p95
      %p278 = pneg %p92
      %p279 = pneg %p116
      %p280 = pneg %p113
      %p281 = pneg %p137
      %p282 = pneg %p134
      %p283 = pneg %p158
      %p284 = pneg %p155
      %p285 = pneg %p179
      %p286 = pneg %p176
      %p287 = pneg %p207
      %p288 = pneg %p204
      %s289 = smul.u32 2, %s23
      %p290 = scmp.lt.s32.totalorder %s22, 1
      %s291 = scalar_select %p290, %s22, 1
      %p292 = scmp.lt.s32.totalorder %s289, 1
      %s293 = scalar_select %p292, %s289, 1
      %s294 = smul.addr %s291, 2
      %s295 = sadd.s32 %s293, %s294
      %s296 = smul.addr %s295, 4
      %s297 = scalar_lea.vmem %s7, %s296
      %s298 = smul.u32 2, %s23
      %p299 = scmp.lt.s32.totalorder %s22, 1
      %s300 = scalar_select %p299, %s22, 1
      %p301 = scmp.lt.s32.totalorder %s298, 1
      %s302 = scalar_select %p301, %s298, 1
      %s303 = smul.addr %s300, 2
      %s304 = sadd.s32 %s302, %s303
      %s305 = smul.addr %s304, 4
      %s306 = scalar_lea.vmem %s0, %s305
      %s307 = smul.u32 2, %s23
      %s308 = smul.u32 2, %s23
      %p309 = scmp.lt.s32.totalorder %s22, 1
      %s310 = scalar_select %p309, %s22, 1
      %p311 = scmp.lt.s32.totalorder %s308, 1
      %s312 = scalar_select %p311, %s308, 1
      %s313 = smul.addr %s310, 2
      %s314 = sadd.s32 %s312, %s313
      %s315 = smul.addr %s314, 4
      %s316 = scalar_lea.vmem %s7, %s315
      %s317 = smul.u32 2, %s23
      %v319 = vld [vmem:[%s306] sm:$0x77]
      %v321 = vcombine.high %v319, %v319
      %v323 = vpack.c.bf16 %v319, %v319
      %v324 = vpack.c.bf16 %v321, %v321
      %v325 = vld [vmem:[%s1] sm:$0xf]
      %v326 = vld [vmem:[%s1 + $0x4] sm:$0xf]
      %v327 = vld [vmem:[%s1 + $0x8] sm:$0xf]
      %v328 = vld [vmem:[%s1 + $0xc] sm:$0xf]
      %v329 = vld [vmem:[%s2] sm:$0xff]
      %v330 = vld [vmem:[%s2 + $0x8] sm:$0xff]
      %v331 = vld [vmem:[%s2 + $0x10] sm:$0xff]
      %v332 = vld [vmem:[%s2 + $0x18] sm:$0xff]
      %334 = vset.pattern.permute.xlu0 0
      %335 = vperm.xlu0 %334, %v329
      %v336 = vpop.permute.xlu0 %335
      %339 = vset.pattern.permute.xlu0 0
      %340 = vperm.xlu0 %339, %v330
      %v341 = vpop.permute.xlu0 %340
      %344 = vset.pattern.permute.xlu0 0
      %345 = vperm.xlu0 %344, %v331
      %v346 = vpop.permute.xlu0 %345
      %349 = vset.pattern.permute.xlu0 0
      %350 = vperm.xlu0 %349, %v332
      %v351 = vpop.permute.xlu0 %350
      %v357 = vunpack.c.l.b16 %v325
      %v358 = vunpack.c.l.b16 %v326
      %v359 = vunpack.c.l.b16 %v327
      %v360 = vunpack.c.l.b16 %v328
      %v361 = vpack.c.b16 %v358, %v357
      %v362 = vpack.c.b16 %v360, %v359
      %vm363 = vcmask 23552
      %v365 = vsel %vm363, %v361, 0
      %v368 = vsel %vm363, %v362, 0
      %vm370 = vcmask 1040384
      %vm371 = vcmask 1041408
      %v372 = vsel %vm370, 4294967295, 65535
      %v373 = vsel %vm371, %v372, 0
      %v375 = vand.u32 %v323, %v373
      %v378 = vand.u32 %v324, %v373
      %380 = vmatprep.subr.bf16.mxu0 %v378
      %381 = vmatpush1.bf16.msra.mxu0 %v375
      %382 = vmatprep.subr.bf16.mxu0 0
      %383 = vmatpush1.bf16.msra.mxu0 0
      %384 = vmatprep.subr.bf16.mxu0 0
      %385 = vmatpush1.bf16.msra.mxu0 0
      %386 = vmatprep.subr.bf16.mxu0 0
      %387 = vmatpush1.bf16.msra.mxu0 0
      %388 = vmatprep.subr.bf16.mxu0 0
      %389 = vmatpush1.bf16.msra.mxu0 0
      %390 = vmatprep.subr.bf16.mxu0 0
      %391 = vmatpush1.bf16.msra.mxu0 0
      %392 = vmatprep.subr.bf16.mxu0 0
      %393 = vmatpush1.bf16.msra.mxu0 0
      %394 = vmatprep.subr.bf16.mxu0 0
      %395 = vmatpush1.bf16.msra.mxu0 0
      %396 = vmatprep.subr.bf16.mxu0 0
      %397 = vmatpush1.bf16.msra.mxu0 0
      %398 = vmatprep.subr.bf16.mxu0 0
      %399 = vmatpush1.bf16.msra.mxu0 0
      %400 = vmatprep.subr.bf16.mxu0 0
      %401 = vmatpush1.bf16.msra.mxu0 0
      %402 = vmatprep.subr.bf16.mxu0 0
      %403 = vmatpush1.bf16.msra.mxu0 0
      %404 = vmatprep.subr.bf16.mxu0 0
      %405 = vmatpush1.bf16.msra.mxu0 0
      %406 = vmatprep.subr.bf16.mxu0 0
      %407 = vmatpush1.bf16.msra.mxu0 0
      %408 = vmatprep.subr.bf16.mxu0 0
      %409 = vmatpush1.bf16.msra.mxu0 0
      %410 = vmatprep.subr.bf16.mxu0 0
      %411 = vmatpush1.bf16.msra.mxu0 0
      %412 = vmatprep.mubr.bf16.mxu0 0
      %413 = vmatmul.mubr.bf16.gmra.mrb[0].mxu0 %v365
      %v414 = vpop.f32.mrb[0].mxu0
      %v415 = vadd.f32 %v336, %v414
      %v416 = vpop.f32.mrb[0].mxu0
      %v417 = vadd.f32 %v336, %v416
      %v418 = vpop.f32.mrb[0].mxu0
      %v419 = vadd.f32 %v341, %v418
      %v420 = vpop.f32.mrb[0].mxu0
      %v421 = vadd.f32 %v341, %v420
      %422 = vmatprep.mubr.bf16.mxu0 0
      %423 = vmatmul.mubr.bf16.gmra.mrb[0].mxu0 %v368
      %v424 = vpop.f32.mrb[0].mxu0
      %v425 = vadd.f32 %v346, %v424
      %v426 = vpop.f32.mrb[0].mxu0
      %v427 = vadd.f32 %v346, %v426
      %v428 = vpop.f32.mrb[0].mxu0
      %v429 = vadd.f32 %v351, %v428
      %v430 = vpop.f32.mrb[0].mxu0
      %v431 = vadd.f32 %v351, %v430
      %432 = vdwg.mxu0
      %v433 = vmax.f32 %v415, 0.0
      %v434 = vmax.f32 %v417, 0.0
      %v435 = vmax.f32 %v419, 0.0
      %v436 = vmax.f32 %v421, 0.0
      %v437 = vmax.f32 %v425, 0.0
      %v438 = vmax.f32 %v427, 0.0
      %v439 = vmax.f32 %v429, 0.0
      %v440 = vmax.f32 %v431, 0.0
      %v441 = vpack.c.bf16 %v435, %v433
      %v442 = vpack.c.bf16 %v436, %v434
      %v443 = vpack.c.bf16 %v439, %v437
      %v444 = vpack.c.bf16 %v440, %v438
      %v445 = vld [vmem:[%s3] sm:$0xf]
      %v446 = vld [vmem:[%s3 + $0x4] sm:$0xf]
      %v447 = vld [vmem:[%s3 + $0x8] sm:$0xf]
      %v448 = vld [vmem:[%s3 + $0xc] sm:$0xf]
      %v449 = vld [vmem:[%s4] sm:$0xff]
      %v450 = vld [vmem:[%s4 + $0x8] sm:$0xff]
      %v451 = vld [vmem:[%s4 + $0x10] sm:$0xff]
      %v452 = vld [vmem:[%s4 + $0x18] sm:$0xff]
      %454 = vset.pattern.permute.xlu0 0
      %455 = vperm.xlu0 %454, %v449
      %v456 = vpop.permute.xlu0 %455
      %459 = vset.pattern.permute.xlu0 0
      %460 = vperm.xlu0 %459, %v450
      %v461 = vpop.permute.xlu0 %460
      %464 = vset.pattern.permute.xlu0 0
      %465 = vperm.xlu0 %464, %v451
      %v466 = vpop.permute.xlu0 %465
      %469 = vset.pattern.permute.xlu0 0
      %470 = vperm.xlu0 %469, %v452
      %v471 = vpop.permute.xlu0 %470
      %v477 = vunpack.c.l.b16 %v445
      %v478 = vunpack.c.l.b16 %v446
      %v479 = vunpack.c.l.b16 %v447
      %v480 = vunpack.c.l.b16 %v448
      %v481 = vpack.c.b16 %v478, %v477
      %v482 = vpack.c.b16 %v480, %v479
      %vm483 = vcmask 261120
      %v485 = vsel %vm483, %v481, 0
      %v488 = vsel %vm483, %v482, 0
      %490 = vmatprep.subr.bf16.mxu0 %v442
      %491 = vmatpush1.bf16.msra.mxu0 %v441
      %492 = vmatprep.subr.bf16.mxu0 %v444
      %493 = vmatpush1.bf16.msra.mxu0 %v443
      %494 = vmatprep.subr.bf16.mxu0 0
      %495 = vmatpush1.bf16.msra.mxu0 0
      %496 = vmatprep.subr.bf16.mxu0 0
      %497 = vmatpush1.bf16.msra.mxu0 0
      %498 = vmatprep.subr.bf16.mxu0 0
      %499 = vmatpush1.bf16.msra.mxu0 0
      %500 = vmatprep.subr.bf16.mxu0 0
      %501 = vmatpush1.bf16.msra.mxu0 0
      %502 = vmatprep.subr.bf16.mxu0 0
      %503 = vmatpush1.bf16.msra.mxu0 0
      %504 = vmatprep.subr.bf16.mxu0 0
      %505 = vmatpush1.bf16.msra.mxu0 0
      %506 = vmatprep.subr.bf16.mxu0 0
      %507 = vmatpush1.bf16.msra.mxu0 0
      %508 = vmatprep.subr.bf16.mxu0 0
      %509 = vmatpush1.bf16.msra.mxu0 0
      %510 = vmatprep.subr.bf16.mxu0 0
      %511 = vmatpush1.bf16.msra.mxu0 0
      %512 = vmatprep.subr.bf16.mxu0 0
      %513 = vmatpush1.bf16.msra.mxu0 0
      %514 = vmatprep.subr.bf16.mxu0 0
      %515 = vmatpush1.bf16.msra.mxu0 0
      %516 = vmatprep.subr.bf16.mxu0 0
      %517 = vmatpush1.bf16.msra.mxu0 0
      %518 = vmatprep.subr.bf16.mxu0 0
      %519 = vmatpush1.bf16.msra.mxu0 0
      %520 = vmatprep.subr.bf16.mxu0 0
      %521 = vmatpush1.bf16.msra.mxu0 0
      %522 = vmatprep.mubr.bf16.mxu0 0
      %523 = vmatmul.mubr.bf16.gmra.mrb[0].mxu0 %v485
      %v524 = vpop.f32.mrb[0].mxu0
      %v525 = vadd.f32 %v456, %v524
      %v526 = vpop.f32.mrb[0].mxu0
      %v527 = vadd.f32 %v456, %v526
      %v528 = vpop.f32.mrb[0].mxu0
      %v529 = vadd.f32 %v461, %v528
      %v530 = vpop.f32.mrb[0].mxu0
      %v531 = vadd.f32 %v461, %v530
      %532 = vmatprep.mubr.bf16.mxu0 0
      %533 = vmatmul.mubr.bf16.gmra.mrb[0].mxu0 %v488
      %v534 = vpop.f32.mrb[0].mxu0
      %v535 = vadd.f32 %v466, %v534
      %v536 = vpop.f32.mrb[0].mxu0
      %v537 = vadd.f32 %v466, %v536
      %v538 = vpop.f32.mrb[0].mxu0
      %v539 = vadd.f32 %v471, %v538
      %v540 = vpop.f32.mrb[0].mxu0
      %v541 = vadd.f32 %v471, %v540
      %542 = vdwg.mxu0
      %v543 = vmax.f32 %v525, 0.0
      %v544 = vmax.f32 %v527, 0.0
      %v545 = vmax.f32 %v529, 0.0
      %v546 = vmax.f32 %v531, 0.0
      %v547 = vmax.f32 %v535, 0.0
      %v548 = vmax.f32 %v537, 0.0
      %v549 = vmax.f32 %v539, 0.0
      %v550 = vmax.f32 %v541, 0.0
      %v551 = vpack.c.bf16 %v545, %v543
      %v552 = vpack.c.bf16 %v546, %v544
      %v553 = vpack.c.bf16 %v549, %v547
      %v554 = vpack.c.bf16 %v550, %v548
      %v555 = vld [vmem:[%s5] sm:$0x3]
      %v556 = vld [vmem:[%s6] sm:$0x7]
      %558 = vset.pattern.permute.xlu0 0
      %559 = vperm.xlu0 %558, %v556
      %v560 = vpop.permute.xlu0 %559
      %v563 = vsel %vm483, %v555, 0
      %565 = vmatprep.subr.bf16.mxu0 %v552
      %566 = vmatpush1.bf16.msra.mxu0 %v551
      %567 = vmatprep.subr.bf16.mxu0 %v554
      %568 = vmatpush1.bf16.msra.mxu0 %v553
      %569 = vmatprep.subr.bf16.mxu0 0
      %570 = vmatpush1.bf16.msra.mxu0 0
      %571 = vmatprep.subr.bf16.mxu0 0
      %572 = vmatpush1.bf16.msra.mxu0 0
      %573 = vmatprep.subr.bf16.mxu0 0
      %574 = vmatpush1.bf16.msra.mxu0 0
      %575 = vmatprep.subr.bf16.mxu0 0
      %576 = vmatpush1.bf16.msra.mxu0 0
      %577 = vmatprep.subr.bf16.mxu0 0
      %578 = vmatpush1.bf16.msra.mxu0 0
      %579 = vmatprep.subr.bf16.mxu0 0
      %580 = vmatpush1.bf16.msra.mxu0 0
      %581 = vmatprep.subr.bf16.mxu0 0
      %582 = vmatpush1.bf16.msra.mxu0 0
      %583 = vmatprep.subr.bf16.mxu0 0
      %584 = vmatpush1.bf16.msra.mxu0 0
      %585 = vmatprep.subr.bf16.mxu0 0
      %586 = vmatpush1.bf16.msra.mxu0 0
      %587 = vmatprep.subr.bf16.mxu0 0
      %588 = vmatpush1.bf16.msra.mxu0 0
      %589 = vmatprep.subr.bf16.mxu0 0
      %590 = vmatpush1.bf16.msra.mxu0 0
      %591 = vmatprep.subr.bf16.mxu0 0
      %592 = vmatpush1.bf16.msra.mxu0 0
      %593 = vmatprep.subr.bf16.mxu0 0
      %594 = vmatpush1.bf16.msra.mxu0 0
      %595 = vmatprep.subr.bf16.mxu0 0
      %596 = vmatpush1.bf16.msra.mxu0 0
      %597 = vmatprep.mubr.bf16.mxu0 0
      %598 = vmatmul.mubr.bf16.gmra.mrb[0].mxu0 %v563
      %v599 = vpop.f32.mrb[0].mxu0
      %v600 = vadd.f32 %v560, %v599
      %v601 = vpop.f32.mrb[0].mxu0
      %v602 = vadd.f32 %v560, %v601
      %v603 = vpop.f32.mrb[0].mxu0
      %v604 = vpop.f32.mrb[0].mxu0
      %605 = vdwg.mxu0
      %v608 = vcombine.low %v600, %v602
      %610 = vst [vmem:[%s316] sm:$0x77] %v608
      %s611 = smul.u32 2, %s23
      %p612 = scmp.lt.s32.totalorder %s22, 1
      %s613 = scalar_select %p612, %s22, 1
      %p614 = scmp.lt.s32.totalorder %s611, 1
      %s615 = scalar_select %p614, %s611, 1
      %s616 = smul.addr %s613, 2
      %s617 = sadd.s32 %s615, %s616
      %s618 = smul.addr %s617, 4
      %s619 = scalar_lea.vmem %s7, %s618
      // Predicated region
      $region49: #{tpu_custom_call.1} parent=47 // pred_check
        %p620 = pneg %p204
      $region50: #{tpu_custom_call.1} parent=47 // pred_check_branch
        %622 = sbr.rel (%p620) target = $region52
      $region51: #{tpu_custom_call.1} parent=47 // pred_region
        %s623 = smul.u32 2, %s23
      $region52: #{tpu_custom_call.1} parent=47 // pred_fallthru
        _
    $region48: #{tpu_custom_call.1} parent=5 // pred_fallthru
      _
    %p624 = scmp.le.s32.totalorder 2, %s13
    // Predicated region
    $region53: #{tpu_custom_call.1} parent=5 // pred_check
      %p625 = pneg %p624
    $region54: #{tpu_custom_call.1} parent=5 // pred_check_branch
      %627 = sbr.rel (%p625) target = $region56
    $region55: #{tpu_custom_call.1} parent=5 // pred_region
      %s628 = ssub.s32 %s13, 2
      // Predicated region
      $region57: #{tpu_custom_call.1} parent=55 // pred_check
        %p629 = pneg %p210
      $region58: #{tpu_custom_call.1} parent=55 // pred_check_branch
        %631 = sbr.rel (%p629) target = $region60
      $region59: #{tpu_custom_call.1} parent=55 // pred_region
        %s632 = smul.u32 2, %s25
        %p633 = scmp.lt.s32.totalorder %s24, 1
        %s634 = scalar_select %p633, %s24, 1
        %p635 = scmp.lt.s32.totalorder %s632, 1
        %s636 = scalar_select %p635, %s632, 1
        %s637 = smul.addr %s634, 2
        %s638 = sadd.s32 %s636, %s637
        %s639 = smul.addr %s638, 4
        %s640 = scalar_lea.vmem %s7, %s639
      $region60: #{tpu_custom_call.1} parent=55 // pred_fallthru
        _
    $region56: #{tpu_custom_call.1} parent=5 // pred_fallthru
      _
  $region6: #{tpu_custom_call.1} parent=0 // loop_footer
    %s17 = sadd.s32 1, %s13
  $region7: #{tpu_custom_call.1} parent=0 // loop_footer_branch
    %12 = sbr.rel target = $region3
  $region8: #{tpu_custom_call.1} parent=0 // loop_exit
    _

</llo_original>
